<compile_context>
chip_gen: v7x
topology: tpu7x:2x2x1
jax: 0.10.0
libtpu: 0.0.40
codegen_flags: <defaults>
</compile_context>

<pallas_src>
import math

import jax
import jax.numpy as jnp
from jax import lax
from jax.experimental import pallas as pl
from jax.experimental.pallas import tpu as pltpu

LANES = 128
CHUNK_ROWS = 256                           # rows per in-kernel accumulation chunk (mult. of 8 & 16)
TARGET_BYTES_PER_INPUT = 4 * 1024 * 1024   # ~4 MiB per input per grid step (review: 2-4 MiB)
NUM_CORE_SPLITS = 2                        # leading grid axis for a 2-TensorCore split on v7x
PAD_LOGIT = -1e4                           # logsigmoid(1e4) == 0 in f32 -> padded elems contribute 0
VMEM_LIMIT_BYTES = 32 * 1024 * 1024        # explicit scoped-VMEM limit (v5e default is only 16 MiB)


def _cdiv(a, b):
    return (a + b - 1) // b


def _round_up(a, b):
    return _cdiv(a, b) * b


def _make_bbce_sums_kernel(chunk_rows: int, n_chunks: int):
    """Kernel accumulating (8,128) slabs for [sum(t), sum(t*ls(x)), sum((1-t)*ls(-x))]."""
    g = chunk_rows // 8

    def kernel(logits_ref, targets_ref, out_ref):
        # out_ref: (1, 3, 8, 128) f32 accumulator, resident across the reduction grid axis.
        @pl.when(pl.program_id(1) == 0)
        def _():
            out_ref[...] = jnp.zeros_like(out_ref)

        def chunk_body(k, carry):
            s_t, s_pos, s_neg = carry
            r0 = k * chunk_rows
            if n_chunks > 1:
                r0 = pl.multiple_of(r0, chunk_rows)
            x = logits_ref[pl.ds(r0, chunk_rows), :].astype(jnp.float32)
            t = targets_ref[pl.ds(r0, chunk_rows), :].astype(jnp.float32)
            # stable logsigmoid(x) = min(x,0) - log1p(exp(-|x|));  logsigmoid(-x) = logsigmoid(x) - x
            ls_pos = jnp.minimum(x, 0.0) - jnp.log1p(jnp.exp(-jnp.abs(x)))
            ls_neg = ls_pos - x
            # (chunk,128) -> (g,8,128): layout-preserving sublane split; summing over the leading
            # axis is pure VPU adds into vreg-resident (8,128) accumulators (no big VMEM temps).
            # TODO(synk): on v7x (VALU-bound regime) this row reduction could be offloaded to the
            #             idle MXU with a ones-vector matmul.
            s_t = s_t + jnp.sum(t.reshape(g, 8, LANES), axis=0)
            s_pos = s_pos + jnp.sum((t * ls_pos).reshape(g, 8, LANES), axis=0)
            s_neg = s_neg + jnp.sum(((1.0 - t) * ls_neg).reshape(g, 8, LANES), axis=0)
            return s_t, s_pos, s_neg

        zeros = jnp.zeros((8, LANES), jnp.float32)
        if n_chunks == 1:
            s_t, s_pos, s_neg = chunk_body(0, (zeros, zeros, zeros))
        else:
            s_t, s_pos, s_neg = lax.fori_loop(0, n_chunks, chunk_body, (zeros, zeros, zeros))

        out_ref[0, 0] += s_t
        out_ref[0, 1] += s_pos
        out_ref[0, 2] += s_neg

    return kernel


def _prep_dtype(a):
    dt = jnp.dtype(a.dtype)
    if not jnp.issubdtype(dt, jnp.floating):
        # 0/1 targets are exact in bf16; halves HBM traffic vs casting to f32.
        return a.astype(jnp.bfloat16)
    if dt == jnp.dtype(jnp.float64):
        return a.astype(jnp.float32)
    if dt.itemsize < 2:
        # fp8 cannot represent the -1e4 pad value; promote to bf16.
        return a.astype(jnp.bfloat16)
    return a


def balanced_binary_cross_entropy_with_logits(outputs, targets, reduction: str = "mean",
                                              gamma: float = 1.0):
    assert outputs.shape == targets.shape, "outputs/targets must have identical shapes"
    n = int(math.prod(outputs.shape))

    x = _prep_dtype(outputs)
    t = _prep_dtype(targets)

    itm_x = jnp.dtype(x.dtype).itemsize
    itm_t = jnp.dtype(t.dtype).itemsize
    sub = 8 if min(itm_x, itm_t) >= 4 else 16                       # sublane multiple (f32: 8, bf16: 16)
    target_rows = max(sub, TARGET_BYTES_PER_INPUT // (LANES * max(itm_x, itm_t)))

    rows = _cdiv(n, LANES)
    rows_aligned = _round_up(rows, sub)

    if rows_aligned <= CHUNK_ROWS:
        # small input: single block, single chunk
        splits = 1
        blocks = 1
        block_rows = rows_aligned
        chunk_rows = block_rows
    else:
        blocks = _cdiv(rows_aligned, target_rows)
        # Only split across the two v7x TensorCores when we have >= 2 blocks; blocks are then
        # rounded to an even count and block_rows re-evened so the split never inflates padding.
        splits = NUM_CORE_SPLITS if blocks >= 2 else 1
        blocks = _round_up(blocks, splits)
        block_rows = _round_up(_cdiv(rows_aligned, blocks), CHUNK_ROWS)
        chunk_rows = CHUNK_ROWS
    n_chunks = block_rows // chunk_rows
    blocks_per_split = blocks // splits
    padded_rows = splits * blocks_per_split * block_rows

    x_flat = jnp.ravel(x)
    t_flat = jnp.ravel(t)
    pad = padded_rows * LANES - n
    if pad:
        # pad-value trick: logits=-1e4, targets=0 -> exactly zero contribution to all three sums
        x_flat = jnp.pad(x_flat, (0, pad), constant_values=PAD_LOGIT)
        t_flat = jnp.pad(t_flat, (0, pad), constant_values=0)
    x2 = x_flat.reshape(padded_rows, LANES)
    t2 = t_flat.reshape(padded_rows, LANES)

    in_index_map = lambda c, i: (c * blocks_per_split + i, 0)

    sums = pl.pallas_call(
        _make_bbce_sums_kernel(chunk_rows, n_chunks),
        out_shape=jax.ShapeDtypeStruct((splits, 3, 8, LANES), jnp.float32),
        grid=(splits, blocks_per_split),
        in_specs=[
            pl.BlockSpec((block_rows, LANES), in_index_map),
            pl.BlockSpec((block_rows, LANES), in_index_map),
        ],
        out_specs=pl.BlockSpec((1, 3, 8, LANES), lambda c, i: (c, 0, 0, 0)),
        compiler_params=pltpu.CompilerParams(
            # TODO(synk): on v7x consider pltpu.CORE_PARALLEL (or pl.core_map over a tensorcore
            # mesh) for the leading axis to guarantee a real 2-TC split; plain "parallel" is kept
            # here for portability across v5e/v6e/v7x.
            dimension_semantics=("parallel", "arbitrary"),
            allow_input_fusion=[True, True],    # fuse ravel/pad/reshape producers into the call
            vmem_limit_bytes=VMEM_LIMIT_BYTES,  # 2 in x 2 buf x 4 MiB fits; v5e default is 16 MiB
        ),
    )(x2, t2)

    sum_t = jnp.sum(sums[:, 0])
    sum_pos = jnp.sum(sums[:, 1])
    sum_neg = jnp.sum(sums[:, 2])

    n_f = jnp.float32(n)
    one_minus_beta = sum_t / n_f          # targets.mean()
    beta = 1.0 - one_minus_beta
    total = -(beta ** gamma * sum_pos + one_minus_beta ** gamma * sum_neg)

    if reduction == "mean":
        return total / n_f
    elif reduction == "sum":
        return total
    else:
        # TODO(synk): reduction='none' would need a second elementwise kernel emitting per-element loss.
        raise NotImplementedError(f"reduction={reduction!r} not supported")


class BalancedBCEWithLogitsLoss:
    """JAX/Pallas port of pytorch_toolbelt.losses.BalancedBCEWithLogitsLoss (no learnable params)."""

    def __init__(self, gamma: float = 1.0, reduction: str = "mean"):
        self.gamma = gamma
        self.reduction = reduction

    def __call__(self, output, target):
        return balanced_binary_cross_entropy_with_logits(
            output, target, reduction=self.reduction, gamma=self.gamma
        )


def _reference(outputs, targets, reduction="mean", gamma=1.0):
    """Pure-JAX reference mirroring the PyTorch code line-by-line."""
    outputs = outputs.astype(jnp.float32)
    targets = targets.astype(jnp.float32)
    one_minus_beta = targets.mean()
    beta = 1.0 - one_minus_beta
    logsig = jax.nn.log_sigmoid
    pos_term = beta ** gamma * targets * logsig(outputs)
    neg_term = one_minus_beta ** gamma * (1.0 - targets) * logsig(-outputs)
    loss = -(pos_term + neg_term)
    if reduction == "mean":
        loss = loss.mean()
    if reduction == "sum":
        loss = loss.sum()
    return loss


if __name__ == "__main__":
    key = jax.random.PRNGKey(0)
    k1, k2, k3, k4, k5, k6 = jax.random.split(key, 6)

    # 1) Small NCHW logits and binary targets, as the loss is typically used after a conv head.
    x_shape = (2, 4, 16, 16)
    logits = jax.random.normal(k1, x_shape, dtype=jnp.float32) * 2.0
    targets = jax.random.bernoulli(k2, p=0.3, shape=x_shape).astype(jnp.float32)

    loss_fn = BalancedBCEWithLogitsLoss(gamma=1.0, reduction="mean")
    loss = jax.block_until_ready(loss_fn(logits, targets))
    ref = _reference(logits, targets, reduction="mean", gamma=1.0)
    assert jnp.allclose(loss, ref, rtol=1e-5, atol=1e-6), (loss, ref)

    # 2) Lane-unaligned shape with sum reduction and gamma=2 -> exercises the pad/tail path.
    y_shape = (3, 5, 17, 9)
    logits2 = jax.random.normal(k3, y_shape, dtype=jnp.float32)
    targets2 = jax.random.bernoulli(k4, p=0.5, shape=y_shape).astype(jnp.float32)
    loss2 = jax.block_until_ready(
        balanced_binary_cross_entropy_with_logits(logits2, targets2, reduction="sum", gamma=2.0))
    ref2 = _reference(logits2, targets2, reduction="sum", gamma=2.0)
    assert jnp.allclose(loss2, ref2, rtol=1e-4, atol=1e-5), (loss2, ref2)

    # 3) Medium bf16 input -> exercises the chunked fori_loop accumulation path (>256 rows).
    z_shape = (2, 4, 128, 130)
    logits3 = (jax.random.normal(k5, z_shape, dtype=jnp.float32) * 3.0).astype(jnp.bfloat16)
    targets3 = jax.random.bernoulli(k6, p=0.25, shape=z_shape).astype(jnp.bfloat16)
    loss3 = jax.block_until_ready(
        balanced_binary_cross_entropy_with_logits(logits3, targets3, reduction="mean", gamma=1.0))
    ref3 = _reference(logits3, targets3, reduction="mean", gamma=1.0)
    assert jnp.allclose(loss3, ref3, rtol=1e-4, atol=1e-5), (loss3, ref3)

    print("KERNEL_OK")
</pallas_src>

<mosaic_0001>
module attributes {stable_mosaic.version = 11 : i64} {
  func.func @kernel(%arg0: i32, %arg1: i32, %arg2: memref<16x128xf32, #tpu.memory_space<vmem>>, %arg3: memref<16x128xf32, #tpu.memory_space<vmem>>, %arg4: memref<1x3x8x128xf32, #tpu.memory_space<vmem>>) attributes {dimension_semantics = [#tpu.dimension_semantics<parallel>, #tpu.dimension_semantics<arbitrary>], iteration_bounds = array<i64: 1, 1>, scalar_prefetch = 0 : i64, scratch_operands = 0 : i64, tpu.core_type = #tpu.core_type<tc>, window_params = [{transform_indices = @transform_0, window_bounds = array<i64: 16, 128>}, {transform_indices = @transform_1, window_bounds = array<i64: 16, 128>}, {transform_indices = @transform_2, window_bounds = array<i64: 1, 3, 8, 128>}]} {
    %c0_i32 = arith.constant 0 : i32
    %0 = arith.cmpi eq, %arg1, %c0_i32 : i32
    %1 = arith.extui %0 : i1 to i32
    %c0_i32_0 = arith.constant 0 : i32
    %2 = arith.cmpi ne, %1, %c0_i32_0 : i32
    scf.if %2 {
      %cst_32 = arith.constant 0.000000e+00 : f32
      %46 = vector.broadcast %cst_32 : f32 to vector<1x3x8x128xf32>
      %c0_33 = arith.constant 0 : index
      %c0_34 = arith.constant 0 : index
      %c0_35 = arith.constant 0 : index
      %c0_36 = arith.constant 0 : index
      %47 = vector.load %arg4[%c0_33, %c0_34, %c0_35, %c0_36] : memref<1x3x8x128xf32, #tpu.memory_space<vmem>>, vector<1x3x8x128xf32>
      tpu.vector_store %arg4[%c0_33, %c0_34, %c0_35, %c0_36], %46 {strides = array<i32>} : memref<1x3x8x128xf32, #tpu.memory_space<vmem>>, vector<1x3x8x128xf32>,
    } else {
    }
    %cst = arith.constant 0.000000e+00 : f32
    %3 = vector.broadcast %cst : f32 to vector<8x128xf32>
    %c0 = arith.constant 0 : index
    %c0_1 = arith.constant 0 : index
    %4 = vector.load %arg2[%c0, %c0_1] : memref<16x128xf32, #tpu.memory_space<vmem>>, vector<16x128xf32>
    %c0_2 = arith.constant 0 : index
    %c0_3 = arith.constant 0 : index
    %5 = vector.load %arg3[%c0_2, %c0_3] : memref<16x128xf32, #tpu.memory_space<vmem>>, vector<16x128xf32>
    %cst_4 = arith.constant 0.000000e+00 : f32
    %6 = vector.broadcast %cst_4 : f32 to vector<16x128xf32>
    %7 = arith.minimumf %4, %6 : vector<16x128xf32>
    %8 = math.absf %4 : vector<16x128xf32>
    %cst_5 = arith.constant 0.000000e+00 : f32
    %9 = vector.broadcast %cst_5 : f32 to vector<16x128xf32>
    %10 = arith.subf %9, %8 : vector<16x128xf32>
    %11 = math.exp %10 : vector<16x128xf32>
    %12 = math.log1p %11 : vector<16x128xf32>
    %13 = arith.subf %7, %12 : vector<16x128xf32>
    %14 = arith.subf %13, %4 : vector<16x128xf32>
    %15 = vector.shape_cast %5 : vector<16x128xf32> to vector<2x8x128xf32>
    %cst_6 = arith.constant dense<0.000000e+00> : vector<8x128xf32>
    %16 = vector.multi_reduction <add>, %15, %cst_6 [0] : vector<2x8x128xf32> to vector<8x128xf32>
    %17 = arith.addf %3, %16 : vector<8x128xf32>
    %18 = arith.mulf %5, %13 : vector<16x128xf32>
    %19 = vector.shape_cast %18 : vector<16x128xf32> to vector<2x8x128xf32>
    %cst_7 = arith.constant dense<0.000000e+00> : vector<8x128xf32>
    %20 = vector.multi_reduction <add>, %19, %cst_7 [0] : vector<2x8x128xf32> to vector<8x128xf32>
    %21 = arith.addf %3, %20 : vector<8x128xf32>
    %cst_8 = arith.constant 1.000000e+00 : f32
    %22 = vector.broadcast %cst_8 : f32 to vector<16x128xf32>
    %23 = arith.subf %22, %5 : vector<16x128xf32>
    %24 = arith.mulf %23, %14 : vector<16x128xf32>
    %25 = vector.shape_cast %24 : vector<16x128xf32> to vector<2x8x128xf32>
    %cst_9 = arith.constant dense<0.000000e+00> : vector<8x128xf32>
    %26 = vector.multi_reduction <add>, %25, %cst_9 [0] : vector<2x8x128xf32> to vector<8x128xf32>
    %27 = arith.addf %3, %26 : vector<8x128xf32>
    %c0_10 = arith.constant 0 : index
    %c0_11 = arith.constant 0 : index
    %c0_12 = arith.constant 0 : index
    %c0_13 = arith.constant 0 : index
    %28 = vector.load %arg4[%c0_10, %c0_11, %c0_12, %c0_13] : memref<1x3x8x128xf32, #tpu.memory_space<vmem>>, vector<1x1x8x128xf32>
    %29 = vector.shape_cast %28 : vector<1x1x8x128xf32> to vector<8x128xf32>
    %30 = arith.addf %29, %17 : vector<8x128xf32>
    %c0_14 = arith.constant 0 : index
    %c0_15 = arith.constant 0 : index
    %c0_16 = arith.constant 0 : index
    %c0_17 = arith.constant 0 : index
    %31 = vector.load %arg4[%c0_14, %c0_15, %c0_16, %c0_17] : memref<1x3x8x128xf32, #tpu.memory_space<vmem>>, vector<1x1x8x128xf32>
    %32 = vector.shape_cast %31 : vector<1x1x8x128xf32> to vector<8x128xf32>
    %33 = vector.shape_cast %30 : vector<8x128xf32> to vector<1x1x8x128xf32>
    tpu.vector_store %arg4[%c0_14, %c0_15, %c0_16, %c0_17], %33 {strides = array<i32>} : memref<1x3x8x128xf32, #tpu.memory_space<vmem>>, vector<1x1x8x128xf32>,
    %c0_18 = arith.constant 0 : index
    %c1 = arith.constant 1 : index
    %c0_19 = arith.constant 0 : index
    %c0_20 = arith.constant 0 : index
    %34 = vector.load %arg4[%c0_18, %c1, %c0_19, %c0_20] : memref<1x3x8x128xf32, #tpu.memory_space<vmem>>, vector<1x1x8x128xf32>
    %35 = vector.shape_cast %34 : vector<1x1x8x128xf32> to vector<8x128xf32>
    %36 = arith.addf %35, %21 : vector<8x128xf32>
    %c0_21 = arith.constant 0 : index
    %c1_22 = arith.constant 1 : index
    %c0_23 = arith.constant 0 : index
    %c0_24 = arith.constant 0 : index
    %37 = vector.load %arg4[%c0_21, %c1_22, %c0_23, %c0_24] : memref<1x3x8x128xf32, #tpu.memory_space<vmem>>, vector<1x1x8x128xf32>
    %38 = vector.shape_cast %37 : vector<1x1x8x128xf32> to vector<8x128xf32>
    %39 = vector.shape_cast %36 : vector<8x128xf32> to vector<1x1x8x128xf32>
    tpu.vector_store %arg4[%c0_21, %c1_22, %c0_23, %c0_24], %39 {strides = array<i32>} : memref<1x3x8x128xf32, #tpu.memory_space<vmem>>, vector<1x1x8x128xf32>,
    %c0_25 = arith.constant 0 : index
    %c2 = arith.constant 2 : index
    %c0_26 = arith.constant 0 : index
    %c0_27 = arith.constant 0 : index
    %40 = vector.load %arg4[%c0_25, %c2, %c0_26, %c0_27] : memref<1x3x8x128xf32, #tpu.memory_space<vmem>>, vector<1x1x8x128xf32>
    %41 = vector.shape_cast %40 : vector<1x1x8x128xf32> to vector<8x128xf32>
    %42 = arith.addf %41, %27 : vector<8x128xf32>
    %c0_28 = arith.constant 0 : index
    %c2_29 = arith.constant 2 : index
    %c0_30 = arith.constant 0 : index
    %c0_31 = arith.constant 0 : index
    %43 = vector.load %arg4[%c0_28, %c2_29, %c0_30, %c0_31] : memref<1x3x8x128xf32, #tpu.memory_space<vmem>>, vector<1x1x8x128xf32>
    %44 = vector.shape_cast %43 : vector<1x1x8x128xf32> to vector<8x128xf32>
    %45 = vector.shape_cast %42 : vector<8x128xf32> to vector<1x1x8x128xf32>
    tpu.vector_store %arg4[%c0_28, %c2_29, %c0_30, %c0_31], %45 {strides = array<i32>} : memref<1x3x8x128xf32, #tpu.memory_space<vmem>>, vector<1x1x8x128xf32>,
    return
  }
  func.func @transform_0(%arg0: i32, %arg1: i32) -> (i32, i32) {
    %c1_i32 = arith.constant 1 : i32
    %0 = arith.muli %arg0, %c1_i32 : i32
    %1 = arith.addi %0, %arg1 : i32
    %c0_i32 = arith.constant 0 : i32
    %c0_i32_0 = arith.constant 0 : i32
    return %1, %c0_i32 : i32, i32
  }
  func.func @transform_1(%arg0: i32, %arg1: i32) -> (i32, i32) {
    %c1_i32 = arith.constant 1 : i32
    %0 = arith.muli %arg0, %c1_i32 : i32
    %1 = arith.addi %0, %arg1 : i32
    %c0_i32 = arith.constant 0 : i32
    %c0_i32_0 = arith.constant 0 : i32
    return %1, %c0_i32 : i32, i32
  }
  func.func @transform_2(%arg0: i32, %arg1: i32) -> (i32, i32, i32, i32) {
    %c0_i32 = arith.constant 0 : i32
    %c0_i32_0 = arith.constant 0 : i32
    %c0_i32_1 = arith.constant 0 : i32
    %c0_i32_2 = arith.constant 0 : i32
    return %arg0, %c0_i32, %c0_i32_0, %c0_i32_1 : i32, i32, i32, i32
  }
}

</mosaic_0001>

<llo_original>
// kernel: tpu_custom_call.1
$region0: #{tpu_custom_call.1}
  #allocation0 [shape = 'u32[]', space=smem, size = 0x4, offset = 0x4, fixed_abs, tag = 'smem constant byte address 0x4 - core index']
  #allocation1 [shape = 'u32[144,128]{1,0:T(1,128)}', space=vmem, size = 0x12000, scoped, tag = 'internal scratch']
  %s0 = inlined_call_operand.hbm [shape: f32[16,128], index: 0, kind: input, shape index: {}]
  %s1 = inlined_call_operand.hbm [shape: f32[16,128], index: 1, kind: input, shape index: {}]
  %s2 = inlined_call_operand.hbm [shape: f32[1,3,8,128], index: 2, kind: output, shape index: {}]
  %s3 = sld [smem:[#allocation0]]
  $region30: #{tpu_custom_call.1} parent=0
    _
  %s5 = ssub.s32 1, %s3
  %s6 = scalar_select 0, %s5, %s3
  $region1: #{tpu_custom_call.1} parent=0
    #allocation2 [shape = 'u8[8192]{0}', space=vmem, size = 0x2000, scoped, tag = 'input window, operand 0, single buffered']
    #allocation3 [shape = 's32[1]{0}', space=sflag, size = 0x4, scoped, tag = 'scoped memory for tpu_custom_call.1']
    #allocation4 [shape = 's32[1]{0}', space=sflag, size = 0x4, scoped, tag = 'scoped memory for tpu_custom_call.1']
    #allocation5 [shape = 'u8[8192]{0}', space=vmem, size = 0x2000, scoped, tag = 'input window, operand 1, single buffered']
    #allocation6 [shape = 's32[1]{0}', space=sflag, size = 0x4, scoped, tag = 'scoped memory for tpu_custom_call.1']
    #allocation7 [shape = 'u8[12288]{0}', space=vmem, size = 0x3000, scoped, tag = 'output window, operand 0, single buffered']
    %7 = vsyncpa [#allocation3], 0
    %8 = vsyncpa [#allocation6], 0
    %9 = vsyncpa [#allocation4], 0
    // Predicated region
    $region2: #{tpu_custom_call.1} parent=1 // pred_check
      _
    $region3: #{tpu_custom_call.1} parent=1 // pred_check_branch
      %11 = sbr.rel (0) target = $region5
    $region4: #{tpu_custom_call.1} parent=1 // pred_region
      %s12 = sadd.s32 0, 0
      %s13 = smul.u32 2, %s12
      %s15 = ssub.s32 256, 256
      %16 = vsyncadd [#allocation3], %s15
      %s17 = smul.addr %s13, 128
      %s18 = scalar_lea.hbm %s0, %s17
      %s19 = sshll.u32 [#allocation2], 4
      %s20 = int_to_ptr.vmem [resolvable:$true] %s19
      %25 = dma.hbm_to_vmem [thread:$0]  %s18, 256, %s20, [#allocation3], 128, 128, 8
    $region5: #{tpu_custom_call.1} parent=1 // pred_fallthru
      _
    // Predicated region
    $region6: #{tpu_custom_call.1} parent=1 // pred_check
      _
    $region7: #{tpu_custom_call.1} parent=1 // pred_check_branch
      %27 = sbr.rel (0) target = $region9
    $region8: #{tpu_custom_call.1} parent=1 // pred_region
      %s28 = sadd.s32 0, 0
      %s29 = smul.u32 2, %s28
      %s31 = ssub.s32 256, 256
      %32 = vsyncadd [#allocation6], %s31
      %s33 = smul.addr %s29, 128
      %s34 = scalar_lea.hbm %s1, %s33
      %s35 = sshll.u32 [#allocation5], 4
      %s36 = int_to_ptr.vmem [resolvable:$true] %s35
      %41 = dma.hbm_to_vmem [thread:$0]  %s34, 256, %s36, [#allocation6], 128, 128, 8
    $region9: #{tpu_custom_call.1} parent=1 // pred_fallthru
      _
    // Predicated region
    $region10: #{tpu_custom_call.1} parent=1 // pred_check
      _
    $region11: #{tpu_custom_call.1} parent=1 // pred_check_branch
      %43 = sbr.rel (0) target = $region13
    $region12: #{tpu_custom_call.1} parent=1 // pred_region
      %44 = dma.done [#allocation3], 256
    $region13: #{tpu_custom_call.1} parent=1 // pred_fallthru
      _
    // Predicated region
    $region14: #{tpu_custom_call.1} parent=1 // pred_check
      _
    $region15: #{tpu_custom_call.1} parent=1 // pred_check_branch
      %46 = sbr.rel (0) target = $region17
    $region16: #{tpu_custom_call.1} parent=1 // pred_region
      %47 = dma.done [#allocation6], 256
    $region17: #{tpu_custom_call.1} parent=1 // pred_fallthru
      _
    %s48 = sadd.s32 0, 0
    %s49 = smul.u32 2, %s48
    %s50 = sadd.s32 0, 0
    %s51 = smul.u32 2, %s50
    %p52 = scmp.eq.s32.totalorder 0, 0
    // Predicated region
    $region18: #{tpu_custom_call.1} parent=1 // pred_check
      %p53 = pneg %p52
    $region19: #{tpu_custom_call.1} parent=1 // pred_check_branch
      %55 = sbr.rel (%p53) target = $region21
    $region20: #{tpu_custom_call.1} parent=1 // pred_region
      %56 = vst [vmem:[#allocation7] sm:$0xff] 0.0
      %57 = vst [vmem:[#allocation7 + $0x8] sm:$0xff] 0.0
      %58 = vst [vmem:[#allocation7 + $0x10] sm:$0xff] 0.0
    $region21: #{tpu_custom_call.1} parent=1 // pred_fallthru
      _
    %v59 = vld [vmem:[#allocation2] sm:$0xff]
    %v60 = vld [vmem:[#allocation2 + $0x8] sm:$0xff]
    %v61 = vld [vmem:[#allocation5] sm:$0xff]
    %v62 = vld [vmem:[#allocation5 + $0x8] sm:$0xff]
    %v63 = vmin.f32 %v59, 0.0
    %v64 = vmin.f32 %v60, 0.0
    %v65 = vand.u32 2147483647, %v59
    %v66 = vand.u32 2147483647, %v60
    %v67 = vsub.f32 0.0, %v65
    %v68 = vsub.f32 0.0, %v66
    %v69 = vmul.f32 %v67, 1.442695
    %v70 = vpow.pop %v69
    %v71 = vmul.f32 %v68, 1.442695
    %v72 = vpow.pop %v71
    %v73 = vadd.f32 %v70, 1.0
    %v74 = vlog2.pop %v73
    %v75 = vmul.f32 %v74, 0.6931472
    %v76 = vmul.f32 -0.5, %v70
    %v77 = vadd.f32 %v76, 1.0
    %v78 = vmul.f32 %v77, %v70
    %v79 = vand.u32 2147483647, %v70
    %vm80 = vcmp.lt.f32.partialorder %v79, 0.0004427343
    %v81 = vsel %vm80, %v78, %v75
    %v82 = vadd.f32 %v72, 1.0
    %v83 = vlog2.pop %v82
    %v84 = vmul.f32 %v83, 0.6931472
    %v85 = vmul.f32 -0.5, %v72
    %v86 = vadd.f32 %v85, 1.0
    %v87 = vmul.f32 %v86, %v72
    %v88 = vand.u32 2147483647, %v72
    %vm89 = vcmp.lt.f32.partialorder %v88, 0.0004427343
    %v90 = vsel %vm89, %v87, %v84
    %v91 = vsub.f32 %v63, %v81
    %v92 = vsub.f32 %v64, %v90
    %v93 = vsub.f32 %v91, %v59
    %v94 = vsub.f32 %v92, %v60
    %v95 = vadd.f32 %v61, %v62
    %v96 = vadd.f32 %v95, 0.0
    %v97 = vmul.f32 %v61, %v91
    %v98 = vmul.f32 %v62, %v92
    %v99 = vadd.f32 %v97, %v98
    %v100 = vadd.f32 %v99, 0.0
    %v101 = vsub.f32 1.0, %v61
    %v102 = vsub.f32 1.0, %v62
    %v103 = vmul.f32 %v101, %v93
    %v104 = vmul.f32 %v102, %v94
    %v105 = vadd.f32 %v103, %v104
    %v106 = vadd.f32 %v105, 0.0
    %v107 = vld [vmem:[#allocation7] sm:$0xff]
    %v108 = vadd.f32 %v107, %v96
    %109 = vst [vmem:[#allocation7] sm:$0xff] %v108
    %s110 = scalar_lea.vmem [#allocation7], 8
    %v111 = vld [vmem:[%s110] sm:$0xff]
    %v112 = vadd.f32 %v111, %v100
    %113 = vst [vmem:[%s110] sm:$0xff] %v112
    %s114 = scalar_lea.vmem [#allocation7], 16
    %v115 = vld [vmem:[%s114] sm:$0xff]
    %v116 = vadd.f32 %v115, %v106
    %117 = vst [vmem:[%s114] sm:$0xff] %v116
    // Predicated region
    $region22: #{tpu_custom_call.1} parent=1 // pred_check
      _
    $region23: #{tpu_custom_call.1} parent=1 // pred_check_branch
      %119 = sbr.rel (0) target = $region25
    $region24: #{tpu_custom_call.1} parent=1 // pred_region
      %s121 = ssub.s32 384, 384
      %122 = vsyncadd [#allocation4], %s121
      %s123 = sshll.u32 [#allocation7], 4
      %s124 = int_to_ptr.vmem [resolvable:$true] %s123
      %129 = dma.vmem_to_hbm [thread:$0]  %s124, 384, %s2, [#allocation4], 128, 128, 8
    $region25: #{tpu_custom_call.1} parent=1 // pred_fallthru
      _
    // Predicated region
    $region26: #{tpu_custom_call.1} parent=1 // pred_check
      _
    $region27: #{tpu_custom_call.1} parent=1 // pred_check_branch
      %131 = sbr.rel (0) target = $region29
    $region28: #{tpu_custom_call.1} parent=1 // pred_region
      %132 = dma.done [#allocation4], 384
    $region29: #{tpu_custom_call.1} parent=1 // pred_fallthru
      _
    %133 = vsyncpa [#allocation3], 1
    %134 = vsyncpa [#allocation6], 1
    %135 = vsyncpa [#allocation4], 1

</llo_original>
